<compile_context>
chip_gen: v7x
topology: tpu7x:2x2x1
jax: 0.10.0
libtpu: 0.0.40
codegen_flags: <defaults>
</compile_context>

<pallas_src>
import functools

import jax
import jax.numpy as jnp
from jax.experimental import pallas as pl
from jax.experimental.pallas import tpu as pltpu


# -----------------------------------------------------------------------------
# Kernel
# -----------------------------------------------------------------------------
def _encoder_kernel(img_ref,     # (tb*C, thw) f32   streamed image chunk
                    wrep_ref,    # (tb*C, NP)  f32   fused weight, per-sample tiled
                    b_ref,       # (1, NP)     f32   fused bias (padded cols 0)
                    cw_ref,      # (1, NP)     f32   class weights (padded cols 0)
                    label_ref,   # (tb, 1)     i32
                    out_ref,     # (tb, NP)    f32   cols 0-1 logits, col2 w*nll, col3 w
                    pooled_acc,  # scratch (tb*C, 1) f32  spatial-sum accumulator
                    *, C, tb):
    h = pl.program_id(1)

    @pl.when(h == 0)
    def _():
        pooled_acc[...] = jnp.zeros_like(pooled_acc)

    # HBM-bandwidth-bound streaming reduction: per (sample, channel) row sum.
    # The XLU lane-reduce is fully hidden under the image DMA.
    pooled_acc[...] += jnp.sum(img_ref[...], axis=-1, keepdims=True)

    @pl.when(h == pl.num_programs(1) - 1)
    def _():
        tbC = tb * C
        # scaled[r, n] = sum_pool[r] * W_fused[r % C, n]  (1/HW folded into W)
        scaled = pooled_acc[...] * wrep_ref[...]                      # (tbC, NP)

        # Group-of-C row reduction via a tiny selection matmul; avoids an
        # in-kernel (tbC,1)->(tb,C) relayout.
        ri = jax.lax.broadcasted_iota(jnp.int32, (tb, tbC), 1)
        ti = jax.lax.broadcasted_iota(jnp.int32, (tb, tbC), 0)
        gather = ((ri >= ti * C) & (ri < (ti + 1) * C)).astype(jnp.float32)
        logits = jnp.dot(gather, scaled,
                         preferred_element_type=jnp.float32) + b_ref[...]  # (tb, NP)

        # Class-weighted cross-entropy over the first 2 lanes only; padded
        # weight/bias columns are zero, so logits[:, 2:] == 0 before masking.
        col = jax.lax.broadcasted_iota(jnp.int32, logits.shape, 1)
        valid = col < 2
        masked = jnp.where(valid, logits, jnp.float32(-1e30))
        m = jnp.max(masked, axis=-1, keepdims=True)
        lse = m + jnp.log(jnp.sum(jnp.exp(masked - m), axis=-1, keepdims=True))
        log_sm = logits - lse

        onehot = (col == label_ref[...]).astype(jnp.float32)          # (tb, NP)
        nll = -jnp.sum(onehot * log_sm, axis=-1, keepdims=True)       # (tb, 1)
        w_i = jnp.sum(onehot * cw_ref[...], axis=-1, keepdims=True)   # (tb, 1)

        # Single lane-dense output block: lanes 0-1 logits, lane 2 w*nll,
        # lane 3 w, lanes >= 4 exactly 0.
        out_ref[...] = (jnp.where(valid, logits, 0.0)
                        + jnp.where(col == 2, w_i * nll, 0.0)
                        + jnp.where(col == 3, w_i, 0.0))


# -----------------------------------------------------------------------------
# Tiling / sizing helpers
# -----------------------------------------------------------------------------
def _vmem_budget():
    """Per-generation sizing: (per-buffer image-tile budget, vmem limit)."""
    try:
        cap = getattr(pltpu.get_tpu_info(), "vmem_capacity_bytes", None)
    except Exception:
        cap = None
    if cap is not None and cap >= 128 * 1024 * 1024:       # v5e / v6e
        return 8 * 1024 * 1024, 96 * 1024 * 1024
    return 4 * 1024 * 1024, 48 * 1024 * 1024               # v7x-safe defaults


def _pick_tb(B):
    # Prefer >=2 batch tiles so the v7x megacore can shard the parallel axis;
    # tiles must be 8-aligned (or the full batch) for the (8,128) rule.
    for tb in (128, 64, 32, 16, 8):
        if B % tb == 0 and B // tb >= 2:
            return tb
    return B


def _pick_thw(HW, rows, budget_bytes):
    if HW % 128 != 0:
        return HW                       # block must then equal the full dim
    thw = max(128, min(HW, (budget_bytes // (4 * rows)) // 128 * 128))
    while HW % thw != 0:
        thw -= 128
    return thw


# -----------------------------------------------------------------------------
# Wrapper
# -----------------------------------------------------------------------------
@functools.partial(jax.jit, static_argnames=("tb", "thw"))
def encoder_forward(img, w_enc, b_enc, w_proj, b_proj, cw, label, *,
                    tb=None, thw=None):
    """img: [B, C, H, W] f32; label: [B] int. Returns (loss, logits[B, 2])."""
    B, C, H, W = img.shape
    HW = H * W
    NP = 128                              # lane-dense output width

    img_budget, vmem_limit = _vmem_budget()
    if tb is None:
        tb = _pick_tb(B)
    if thw is None:
        thw = _pick_thw(HW, tb * C, img_budget)
    assert B % tb == 0 and HW % thw == 0
    assert tb == B or tb % 8 == 0, "batch tile must be 8-aligned or the full batch"
    tbC = tb * C

    # Stream the f32 image as-is: the (B,C,H,W) -> (B*C, HW) reshape is a free
    # row-major relabeling (no copy, no dtype-conversion pass).
    img2 = img.reshape(B * C, HW)

    # Dropout(0.3) is identity at inference and there is no nonlinearity
    # between the stand-in backbone head and proj, so fuse the two Linears
    # offline and fold the 1/HW pooling scale into the fused weight.
    w_f = (w_enc @ w_proj) * (1.0 / HW)                              # (C, 2)
    b_f = b_enc.reshape(1, -1) @ w_proj + b_proj.reshape(1, -1)      # (1, 2)

    wrep = jnp.zeros((tbC, NP), jnp.float32).at[:, :2].set(jnp.tile(w_f, (tb, 1)))
    bpad = jnp.zeros((1, NP), jnp.float32).at[:, :2].set(b_f)
    cwp = jnp.zeros((1, NP), jnp.float32).at[:, :2].set(cw.reshape(1, 2))
    lab2 = label.reshape(B, 1).astype(jnp.int32)

    grid = (B // tb, HW // thw)
    kernel = functools.partial(_encoder_kernel, C=C, tb=tb)

    flops = B * C * HW + 2 * B * tbC * NP
    bytes_accessed = 4 * (img2.size + wrep.size + bpad.size + cwp.size
                          + lab2.size + B * NP)

    out = pl.pallas_call(
        kernel,
        out_shape=jax.ShapeDtypeStruct((B, NP), jnp.float32),
        grid=grid,
        in_specs=[
            pl.BlockSpec((tbC, thw), lambda b, h: (b, h)),   # image stream
            pl.BlockSpec((tbC, NP), lambda b, h: (0, 0)),    # fused weight
            pl.BlockSpec((1, NP), lambda b, h: (0, 0)),      # fused bias
            pl.BlockSpec((1, NP), lambda b, h: (0, 0)),      # class weights
            pl.BlockSpec((tb, 1), lambda b, h: (b, 0)),      # labels
        ],
        out_specs=pl.BlockSpec((tb, NP), lambda b, h: (b, 0)),
        scratch_shapes=[pltpu.VMEM((tbC, 1), jnp.float32)],
        compiler_params=pltpu.CompilerParams(
            dimension_semantics=("parallel", "arbitrary"),
            vmem_limit_bytes=vmem_limit),
        cost_estimate=pl.CostEstimate(flops=flops,
                                      transcendentals=B * NP,
                                      bytes_accessed=bytes_accessed),
    )(img2, wrep, bpad, cwp, lab2)

    logits = out[:, :2]
    # Class-weighted mean over the whole batch (correct even when tiled).
    loss = jnp.sum(out[:, 2]) / jnp.sum(out[:, 3])
    return loss, logits


# -----------------------------------------------------------------------------
# Pure-JAX reference (original f32 torch-style pipeline)
# -----------------------------------------------------------------------------
def encoder_reference(img, w_enc, b_enc, w_proj, b_proj, cw, label):
    B, C, H, W = img.shape
    pooled = jnp.mean(img.reshape(B, C, H * W), axis=-1)        # (B, C)
    hidden = pooled @ w_enc + b_enc.reshape(1, -1)              # (B, D)
    logits = hidden @ w_proj + b_proj.reshape(1, -1)            # (B, 2)
    logp = jax.nn.log_softmax(logits, axis=-1)
    onehot = jax.nn.one_hot(label, 2, dtype=jnp.float32)
    nll = -jnp.sum(onehot * logp, axis=-1)
    w_i = cw[label]
    loss = jnp.sum(w_i * nll) / jnp.sum(w_i)
    return loss, logits


def init_params(key, C, D=1000):
    """Deterministic parameter init (PyTorch-style uniform bounds)."""
    k1, k2, k3, k4 = jax.random.split(key, 4)
    bound_enc = 1.0 / jnp.sqrt(C)
    bound_proj = 1.0 / jnp.sqrt(D)
    w_enc = jax.random.uniform(k1, (C, D), jnp.float32, -bound_enc, bound_enc)
    b_enc = jax.random.uniform(k2, (1, D), jnp.float32, -bound_enc, bound_enc)
    # torch Linear weight is [out, in]; store transposed [in, out] here.
    w_proj = jax.random.uniform(k3, (D, 2), jnp.float32, -bound_proj, bound_proj)
    b_proj = jax.random.uniform(k4, (1, 2), jnp.float32, -bound_proj, bound_proj)
    return w_enc, b_enc, w_proj, b_proj


if __name__ == "__main__":
    key = jax.random.PRNGKey(0)
    k_img, k_param, k_lab = jax.random.split(key, 3)

    B, C, H, W = 2, 4, 16, 16
    img = jax.random.normal(k_img, (B, C, H, W), jnp.float32)
    label = jax.random.randint(k_lab, (B,), 0, 2, jnp.int32)
    cw = jnp.array([0.3, 0.7], jnp.float32)          # class weights `self.cw`

    w_enc, b_enc, w_proj, b_proj = init_params(k_param, C, D=1000)

    # thw=128 -> 2 HW chunks, exercising the cross-chunk pooled accumulation.
    loss, logits = encoder_forward(img, w_enc, b_enc, w_proj, b_proj, cw, label,
                                   tb=B, thw=128)
    jax.block_until_ready((loss, logits))

    loss_ref, logits_ref = encoder_reference(img, w_enc, b_enc, w_proj, b_proj,
                                             cw, label)

    assert logits.shape == (B, 2) and logits.dtype == jnp.float32
    assert loss.shape == () and bool(jnp.isfinite(loss))
    assert bool(jnp.allclose(logits, logits_ref, rtol=1e-3, atol=1e-3))
    assert bool(jnp.allclose(loss, loss_ref, rtol=1e-3, atol=1e-3))
    print("KERNEL_OK")
</pallas_src>

<mosaic_0001>
module attributes {stable_mosaic.version = 11 : i64} {
  func.func @_encoder_kernel(%arg0: i32, %arg1: i32, %arg2: memref<8x128xf32, #tpu.memory_space<vmem>>, %arg3: memref<8x128xf32, #tpu.memory_space<vmem>>, %arg4: memref<1x128xf32, #tpu.memory_space<vmem>>, %arg5: memref<1x128xf32, #tpu.memory_space<vmem>>, %arg6: memref<2x1xi32, #tpu.memory_space<vmem>>, %arg7: memref<2x128xf32, #tpu.memory_space<vmem>>, %arg8: memref<8x1xf32, #tpu.memory_space<vmem>>) attributes {dimension_semantics = [#tpu.dimension_semantics<parallel>, #tpu.dimension_semantics<arbitrary>], iteration_bounds = array<i64: 1, 2>, scalar_prefetch = 0 : i64, scratch_operands = 1 : i64, tpu.core_type = #tpu.core_type<tc>, window_params = [{transform_indices = @transform_0, window_bounds = array<i64: 8, 128>}, {pipeline_mode = #tpu.pipeline_mode<synchronous>, transform_indices = @transform_1, window_bounds = array<i64: 8, 128>}, {pipeline_mode = #tpu.pipeline_mode<synchronous>, transform_indices = @transform_2, window_bounds = array<i64: 1, 128>}, {pipeline_mode = #tpu.pipeline_mode<synchronous>, transform_indices = @transform_3, window_bounds = array<i64: 1, 128>}, {transform_indices = @transform_4, window_bounds = array<i64: 2, 1>}, {transform_indices = @transform_5, window_bounds = array<i64: 2, 128>}]} {
    %c0_i32 = arith.constant 0 : i32
    %0 = arith.cmpi eq, %arg1, %c0_i32 : i32
    %1 = arith.extui %0 : i1 to i32
    %c0_i32_0 = arith.constant 0 : i32
    %2 = arith.cmpi ne, %1, %c0_i32_0 : i32
    scf.if %2 {
      %cst_7 = arith.constant 0.000000e+00 : f32
      %12 = vector.broadcast %cst_7 : f32 to vector<8x1xf32>
      %c0_8 = arith.constant 0 : index
      %c0_9 = arith.constant 0 : index
      %13 = vector.load %arg8[%c0_8, %c0_9] : memref<8x1xf32, #tpu.memory_space<vmem>>, vector<8x1xf32>
      tpu.vector_store %arg8[%c0_8, %c0_9], %12 {strides = array<i32>} : memref<8x1xf32, #tpu.memory_space<vmem>>, vector<8x1xf32>,
    } else {
    }
    %c0 = arith.constant 0 : index
    %c0_1 = arith.constant 0 : index
    %3 = vector.load %arg8[%c0, %c0_1] : memref<8x1xf32, #tpu.memory_space<vmem>>, vector<8x1xf32>
    %c0_2 = arith.constant 0 : index
    %c0_3 = arith.constant 0 : index
    %4 = vector.load %arg2[%c0_2, %c0_3] : memref<8x128xf32, #tpu.memory_space<vmem>>, vector<8x128xf32>
    %cst = arith.constant dense<0.000000e+00> : vector<8xf32>
    %5 = vector.multi_reduction <add>, %4, %cst [1] : vector<8x128xf32> to vector<8xf32>
    %6 = vector.shape_cast %5 : vector<8xf32> to vector<8x1xf32>
    %7 = arith.addf %3, %6 : vector<8x1xf32>
    %c0_4 = arith.constant 0 : index
    %c0_5 = arith.constant 0 : index
    %8 = vector.load %arg8[%c0_4, %c0_5] : memref<8x1xf32, #tpu.memory_space<vmem>>, vector<8x1xf32>
    tpu.vector_store %arg8[%c0_4, %c0_5], %7 {strides = array<i32>} : memref<8x1xf32, #tpu.memory_space<vmem>>, vector<8x1xf32>,
    %c1_i32 = arith.constant 1 : i32
    %9 = arith.cmpi eq, %arg1, %c1_i32 : i32
    %10 = arith.extui %9 : i1 to i32
    %c0_i32_6 = arith.constant 0 : i32
    %11 = arith.cmpi ne, %10, %c0_i32_6 : i32
    scf.if %11 {
      %c0_7 = arith.constant 0 : index
      %c0_8 = arith.constant 0 : index
      %12 = vector.load %arg8[%c0_7, %c0_8] : memref<8x1xf32, #tpu.memory_space<vmem>>, vector<8x1xf32>
      %c0_9 = arith.constant 0 : index
      %c0_10 = arith.constant 0 : index
      %13 = vector.load %arg3[%c0_9, %c0_10] : memref<8x128xf32, #tpu.memory_space<vmem>>, vector<8x128xf32>
      %14 = vector.broadcast %12 : vector<8x1xf32> to vector<8x128xf32>
      %15 = arith.mulf %14, %13 : vector<8x128xf32>
      %16 = tpu.iota {dimensions = array<i32: 1>} : vector<2x8xi32>
      %17 = tpu.iota {dimensions = array<i32: 0>} : vector<2x8xi32>
      %c4_i32 = arith.constant 4 : i32
      %18 = vector.broadcast %c4_i32 : i32 to vector<2x8xi32>
      %19 = arith.muli %17, %18 : vector<2x8xi32>
      %20 = arith.cmpi sge, %16, %19 : vector<2x8xi32>
      %c1_i32_11 = arith.constant 1 : i32
      %21 = vector.broadcast %c1_i32_11 : i32 to vector<2x8xi32>
      %22 = arith.addi %17, %21 : vector<2x8xi32>
      %c4_i32_12 = arith.constant 4 : i32
      %23 = vector.broadcast %c4_i32_12 : i32 to vector<2x8xi32>
      %24 = arith.muli %22, %23 : vector<2x8xi32>
      %25 = arith.cmpi slt, %16, %24 : vector<2x8xi32>
      %26 = arith.andi %20, %25 : vector<2x8xi1>
      %27 = arith.extui %26 : vector<2x8xi1> to vector<2x8xi32>
      %28 = arith.sitofp %27 : vector<2x8xi32> to vector<2x8xf32>
      %cst_13 = arith.constant dense<0.000000e+00> : vector<2x128xf32>
      %29 = tpu.matmul %28, %15, %cst_13 {dimension_numbers = #tpu.dot_dimension_numbers<[1], [0], [0], [1], [0, 0, 1, 1], [], []>} : vector<2x8xf32>, vector<8x128xf32>, vector<2x128xf32> -> vector<2x128xf32>
      %c0_14 = arith.constant 0 : index
      %c0_15 = arith.constant 0 : index
      %30 = vector.load %arg4[%c0_14, %c0_15] : memref<1x128xf32, #tpu.memory_space<vmem>>, vector<1x128xf32>
      %31 = vector.broadcast %30 : vector<1x128xf32> to vector<2x128xf32>
      %32 = arith.addf %29, %31 : vector<2x128xf32>
      %33 = tpu.iota {dimensions = array<i32: 1>} : vector<2x128xi32>
      %c2_i32 = arith.constant 2 : i32
      %34 = vector.broadcast %c2_i32 : i32 to vector<2x128xi32>
      %35 = arith.cmpi slt, %33, %34 : vector<2x128xi32>
      %cst_16 = arith.constant -1.000000e+30 : f32
      %36 = vector.broadcast %cst_16 : f32 to vector<2x128xf32>
      %37 = arith.select %35, %32, %36 : vector<2x128xi1>, vector<2x128xf32>
      %cst_17 = arith.constant dense<0xFF800000> : vector<2xf32>
      %38 = vector.multi_reduction <maximumf>, %37, %cst_17 [1] : vector<2x128xf32> to vector<2xf32>
      %39 = vector.shape_cast %38 : vector<2xf32> to vector<2x1xf32>
      %40 = vector.broadcast %39 : vector<2x1xf32> to vector<2x128xf32>
      %41 = arith.subf %37, %40 : vector<2x128xf32>
      %42 = math.exp %41 : vector<2x128xf32>
      %cst_18 = arith.constant dense<0.000000e+00> : vector<2xf32>
      %43 = vector.multi_reduction <add>, %42, %cst_18 [1] : vector<2x128xf32> to vector<2xf32>
      %44 = vector.shape_cast %43 : vector<2xf32> to vector<2x1xf32>
      %45 = math.log %44 : vector<2x1xf32>
      %46 = arith.addf %39, %45 : vector<2x1xf32>
      %47 = vector.broadcast %46 : vector<2x1xf32> to vector<2x128xf32>
      %48 = arith.subf %32, %47 : vector<2x128xf32>
      %c0_19 = arith.constant 0 : index
      %c0_20 = arith.constant 0 : index
      %49 = vector.load %arg6[%c0_19, %c0_20] : memref<2x1xi32, #tpu.memory_space<vmem>>, vector<2x1xi32>
      %50 = vector.broadcast %49 : vector<2x1xi32> to vector<2x128xi32>
      %51 = arith.cmpi eq, %33, %50 : vector<2x128xi32>
      %52 = arith.extui %51 : vector<2x128xi1> to vector<2x128xi32>
      %53 = arith.sitofp %52 : vector<2x128xi32> to vector<2x128xf32>
      %54 = arith.mulf %53, %48 : vector<2x128xf32>
      %cst_21 = arith.constant dense<0.000000e+00> : vector<2xf32>
      %55 = vector.multi_reduction <add>, %54, %cst_21 [1] : vector<2x128xf32> to vector<2xf32>
      %56 = vector.shape_cast %55 : vector<2xf32> to vector<2x1xf32>
      %cst_22 = arith.constant 0.000000e+00 : f32
      %57 = vector.broadcast %cst_22 : f32 to vector<2x1xf32>
      %58 = arith.subf %57, %56 : vector<2x1xf32>
      %c0_23 = arith.constant 0 : index
      %c0_24 = arith.constant 0 : index
      %59 = vector.load %arg5[%c0_23, %c0_24] : memref<1x128xf32, #tpu.memory_space<vmem>>, vector<1x128xf32>
      %60 = vector.broadcast %59 : vector<1x128xf32> to vector<2x128xf32>
      %61 = arith.mulf %53, %60 : vector<2x128xf32>
      %cst_25 = arith.constant dense<0.000000e+00> : vector<2xf32>
      %62 = vector.multi_reduction <add>, %61, %cst_25 [1] : vector<2x128xf32> to vector<2xf32>
      %63 = vector.shape_cast %62 : vector<2xf32> to vector<2x1xf32>
      %cst_26 = arith.constant 0.000000e+00 : f32
      %64 = vector.broadcast %cst_26 : f32 to vector<2x128xf32>
      %65 = arith.select %35, %32, %64 : vector<2x128xi1>, vector<2x128xf32>
      %c2_i32_27 = arith.constant 2 : i32
      %66 = vector.broadcast %c2_i32_27 : i32 to vector<2x128xi32>
      %67 = arith.cmpi eq, %33, %66 : vector<2x128xi32>
      %68 = arith.mulf %63, %58 : vector<2x1xf32>
      %cst_28 = arith.constant 0.000000e+00 : f32
      %69 = vector.shape_cast %68 : vector<2x1xf32> to vector<2x1xf32>
      %70 = vector.broadcast %69 : vector<2x1xf32> to vector<2x128xf32>
      %71 = vector.broadcast %cst_28 : f32 to vector<2x128xf32>
      %72 = arith.select %67, %70, %71 : vector<2x128xi1>, vector<2x128xf32>
      %73 = arith.addf %65, %72 : vector<2x128xf32>
      %c3_i32 = arith.constant 3 : i32
      %74 = vector.broadcast %c3_i32 : i32 to vector<2x128xi32>
      %75 = arith.cmpi eq, %33, %74 : vector<2x128xi32>
      %cst_29 = arith.constant 0.000000e+00 : f32
      %76 = vector.shape_cast %63 : vector<2x1xf32> to vector<2x1xf32>
      %77 = vector.broadcast %76 : vector<2x1xf32> to vector<2x128xf32>
      %78 = vector.broadcast %cst_29 : f32 to vector<2x128xf32>
      %79 = arith.select %75, %77, %78 : vector<2x128xi1>, vector<2x128xf32>
      %80 = arith.addf %73, %79 : vector<2x128xf32>
      %c0_30 = arith.constant 0 : index
      %c0_31 = arith.constant 0 : index
      %81 = vector.load %arg7[%c0_30, %c0_31] : memref<2x128xf32, #tpu.memory_space<vmem>>, vector<2x128xf32>
      tpu.vector_store %arg7[%c0_30, %c0_31], %80 {strides = array<i32>} : memref<2x128xf32, #tpu.memory_space<vmem>>, vector<2x128xf32>,
    } else {
    }
    return
  }
  func.func @transform_0(%arg0: i32, %arg1: i32) -> (i32, i32) {
    %c0_i32 = arith.constant 0 : i32
    return %arg0, %arg1 : i32, i32
  }
  func.func @transform_1(%arg0: i32, %arg1: i32) -> (i32, i32) {
    %c0_i32 = arith.constant 0 : i32
    %c0_i32_0 = arith.constant 0 : i32
    %c0_i32_1 = arith.constant 0 : i32
    return %c0_i32, %c0_i32_0 : i32, i32
  }
  func.func @transform_2(%arg0: i32, %arg1: i32) -> (i32, i32) {
    %c0_i32 = arith.constant 0 : i32
    %c0_i32_0 = arith.constant 0 : i32
    %c0_i32_1 = arith.constant 0 : i32
    return %c0_i32, %c0_i32_0 : i32, i32
  }
  func.func @transform_3(%arg0: i32, %arg1: i32) -> (i32, i32) {
    %c0_i32 = arith.constant 0 : i32
    %c0_i32_0 = arith.constant 0 : i32
    %c0_i32_1 = arith.constant 0 : i32
    return %c0_i32, %c0_i32_0 : i32, i32
  }
  func.func @transform_4(%arg0: i32, %arg1: i32) -> (i32, i32) {
    %c0_i32 = arith.constant 0 : i32
    %c0_i32_0 = arith.constant 0 : i32
    return %arg0, %c0_i32 : i32, i32
  }
  func.func @transform_5(%arg0: i32, %arg1: i32) -> (i32, i32) {
    %c0_i32 = arith.constant 0 : i32
    %c0_i32_0 = arith.constant 0 : i32
    return %arg0, %c0_i32 : i32, i32
  }
}

</mosaic_0001>

<llo_original>
// kernel: encoder_forward.1
$region0: #{encoder_forward.1}
  #allocation0 [shape = 'u32[]', space=smem, size = 0x4, offset = 0x4, fixed_abs, tag = 'smem constant byte address 0x4 - core index']
  #allocation1 [shape = 'u32[144,128]{1,0:T(1,128)}', space=vmem, size = 0x12000, scoped, tag = 'internal scratch']
  #allocation2 [shape = 'f32[8,1]{1,0:T(8,128)}', space=vmem, size = 0x1000, scoped, tag = 'scratch operand']
  %s0 = inlined_call_operand.vmem [shape: f32[8,256], index: 0, kind: input, shape index: {}]
  %s1 = inlined_call_operand.vmem [shape: f32[8,128], index: 1, kind: input, shape index: {}]
  %s2 = inlined_call_operand.vmem [shape: f32[1,128], index: 2, kind: input, shape index: {}]
  %s3 = inlined_call_operand.vmem [shape: f32[1,128], index: 3, kind: input, shape index: {}]
  %s4 = inlined_call_operand.vmem [shape: s32[2,1], index: 4, kind: input, shape index: {}]
  %s5 = inlined_call_operand.vmem [shape: f32[2,128], index: 5, kind: output, shape index: {}]
  %s6 = sld [smem:[#allocation0]]
  $region61: #{encoder_forward.1} parent=0
    _
  %s8 = ssub.s32 1, %s6
  %s9 = scalar_select 0, %s8, %s6
  loop: start=0, step=1, limit=4
  $region2: #{encoder_forward.1} parent=0 // loop_pre_header
    _
  $region3: #{encoder_forward.1} parent=0 // loop_header
    %s11 = sphi 0, %s15
    %p12 = scmp.ge.s32.totalorder %s11, 4
    %s18 = sphi 0, %s30
    %s19 = sphi 0, %s26
    %s20 = sphi 0, %s18
    %s21 = sphi 0, %s19
    %s22 = sphi 0, %s20
    %s23 = sphi 0, %s21
    %s35 = sphi 0, %s37
    %s38 = sphi 0, %s35
    %s39 = sphi 0, %s38
    %s55 = sphi 0, %s39
    %s59 = sphi 0, %s59
    %s61 = sphi 0, %s59
    %s62 = sphi 0, %s61
    %s76 = sphi 0, %s62
    %s80 = sphi 0, %s80
    %s82 = sphi 0, %s80
    %s83 = sphi 0, %s82
    %s97 = sphi 0, %s83
    %s101 = sphi 0, %s101
    %s103 = sphi 0, %s101
    %s104 = sphi 0, %s103
    %s118 = sphi 0, %s104
    %s124 = sphi 0, %s126
    %s127 = sphi 0, %s124
    %s128 = sphi 0, %s127
    %s144 = sphi 0, %s128
    %s150 = sphi 0, %s152
    %s153 = sphi 0, %s150
    %s154 = sphi 0, %s153
    %s170 = sphi 0, %s154
  $region4: #{encoder_forward.1} parent=0 // loop_header_branch
    %14 = sbr.rel (%p12) target = $region8
  $region5: #{encoder_forward.1} parent=0 // loop_body
    %s16 = ssub.s32 %s11, 1
    %s17 = ssub.s32 %s11, 2
    %s24 = sadd.s32 1, %s19
    %p25 = scmp.ge.s32.totalorder %s24, 2
    %s26 = scalar_select %p25, 0, %s24
    %s27 = sadd.s32 1, %s18
    %s28 = scalar_select %p25, %s27, %s18
    %p29 = scmp.ge.s32.totalorder %s28, 1
    %s30 = scalar_select %p29, 0, %s28
    %s31 = ssub.s32 %s18, %s30
    %s32 = ssub.s32 %s19, %s26
    %s33 = sor.u32 %s31, %s32
    %p34 = scmp.eq.s32.totalorder %s33, 0
    %s36 = sadd.s32 %s35, 1
    %s37 = scalar_select %p34, %s35, %s36
    %p40 = pneg %p34
    %p41 = scmp.eq.s32.totalorder %s11, 1
    %p42 = por %p40, %p41
    %p43 = scmp.ne.s32.totalorder %s35, %s38
    %p44 = scmp.eq.s32.totalorder %s11, 0
    %p45 = por %p43, %p44
    %p46 = scmp.ne.s32.totalorder %s35, %s38
    %p47 = scmp.eq.s32.totalorder %s16, 1
    %p48 = por %p46, %p47
    %p49 = scmp.ne.s32.totalorder %s38, %s39
    %p50 = scmp.eq.s32.totalorder %s16, 0
    %p51 = por %p49, %p50
    %p52 = scmp.ne.s32.totalorder %s38, %s39
    %p53 = scmp.eq.s32.totalorder %s17, 1
    %p54 = por %p52, %p53
    %p56 = scmp.ne.s32.totalorder %s39, %s55
    %p57 = scmp.eq.s32.totalorder %s17, 0
    %p58 = por %p56, %p57
    %s60 = sadd.s32 %s59, 1
    %p63 = scmp.eq.s32.totalorder %s11, 1
    %p64 = scmp.ne.s32.totalorder %s59, %s61
    %p65 = scmp.eq.s32.totalorder %s11, 0
    %p66 = por %p64, %p65
    %p67 = scmp.ne.s32.totalorder %s59, %s61
    %p68 = scmp.eq.s32.totalorder %s16, 1
    %p69 = por %p67, %p68
    %p70 = scmp.ne.s32.totalorder %s61, %s62
    %p71 = scmp.eq.s32.totalorder %s16, 0
    %p72 = por %p70, %p71
    %p73 = scmp.ne.s32.totalorder %s61, %s62
    %p74 = scmp.eq.s32.totalorder %s17, 1
    %p75 = por %p73, %p74
    %p77 = scmp.ne.s32.totalorder %s62, %s76
    %p78 = scmp.eq.s32.totalorder %s17, 0
    %p79 = por %p77, %p78
    %s81 = sadd.s32 %s80, 1
    %p84 = scmp.eq.s32.totalorder %s11, 1
    %p85 = scmp.ne.s32.totalorder %s80, %s82
    %p86 = scmp.eq.s32.totalorder %s11, 0
    %p87 = por %p85, %p86
    %p88 = scmp.ne.s32.totalorder %s80, %s82
    %p89 = scmp.eq.s32.totalorder %s16, 1
    %p90 = por %p88, %p89
    %p91 = scmp.ne.s32.totalorder %s82, %s83
    %p92 = scmp.eq.s32.totalorder %s16, 0
    %p93 = por %p91, %p92
    %p94 = scmp.ne.s32.totalorder %s82, %s83
    %p95 = scmp.eq.s32.totalorder %s17, 1
    %p96 = por %p94, %p95
    %p98 = scmp.ne.s32.totalorder %s83, %s97
    %p99 = scmp.eq.s32.totalorder %s17, 0
    %p100 = por %p98, %p99
    %s102 = sadd.s32 %s101, 1
    %p105 = scmp.eq.s32.totalorder %s11, 1
    %p106 = scmp.ne.s32.totalorder %s101, %s103
    %p107 = scmp.eq.s32.totalorder %s11, 0
    %p108 = por %p106, %p107
    %p109 = scmp.ne.s32.totalorder %s101, %s103
    %p110 = scmp.eq.s32.totalorder %s16, 1
    %p111 = por %p109, %p110
    %p112 = scmp.ne.s32.totalorder %s103, %s104
    %p113 = scmp.eq.s32.totalorder %s16, 0
    %p114 = por %p112, %p113
    %p115 = scmp.ne.s32.totalorder %s103, %s104
    %p116 = scmp.eq.s32.totalorder %s17, 1
    %p117 = por %p115, %p116
    %p119 = scmp.ne.s32.totalorder %s104, %s118
    %p120 = scmp.eq.s32.totalorder %s17, 0
    %p121 = por %p119, %p120
    %s122 = ssub.s32 %s18, %s30
    %p123 = scmp.eq.s32.totalorder %s122, 0
    %s125 = sadd.s32 %s124, 1
    %s126 = scalar_select %p123, %s124, %s125
    %p129 = pneg %p123
    %p130 = scmp.eq.s32.totalorder %s11, 1
    %p131 = por %p129, %p130
    %p132 = scmp.ne.s32.totalorder %s124, %s127
    %p133 = scmp.eq.s32.totalorder %s11, 0
    %p134 = por %p132, %p133
    %p135 = scmp.ne.s32.totalorder %s124, %s127
    %p136 = scmp.eq.s32.totalorder %s16, 1
    %p137 = por %p135, %p136
    %p138 = scmp.ne.s32.totalorder %s127, %s128
    %p139 = scmp.eq.s32.totalorder %s16, 0
    %p140 = por %p138, %p139
    %p141 = scmp.ne.s32.totalorder %s127, %s128
    %p142 = scmp.eq.s32.totalorder %s17, 1
    %p143 = por %p141, %p142
    %p145 = scmp.ne.s32.totalorder %s128, %s144
    %p146 = scmp.eq.s32.totalorder %s17, 0
    %p147 = por %p145, %p146
    %s148 = ssub.s32 %s18, %s30
    %p149 = scmp.eq.s32.totalorder %s148, 0
    %s151 = sadd.s32 %s150, 1
    %s152 = scalar_select %p149, %s150, %s151
    %p155 = pneg %p149
    %p156 = scmp.eq.s32.totalorder %s11, 1
    %p157 = por %p155, %p156
    %p158 = scmp.ne.s32.totalorder %s150, %s153
    %p159 = scmp.eq.s32.totalorder %s11, 0
    %p160 = por %p158, %p159
    %p161 = scmp.ne.s32.totalorder %s150, %s153
    %p162 = scmp.eq.s32.totalorder %s16, 1
    %p163 = por %p161, %p162
    %p164 = scmp.ne.s32.totalorder %s153, %s154
    %p165 = scmp.eq.s32.totalorder %s16, 0
    %p166 = por %p164, %p165
    %p167 = scmp.ne.s32.totalorder %s153, %s154
    %p168 = scmp.eq.s32.totalorder %s17, 1
    %p169 = por %p167, %p168
    %p171 = scmp.ne.s32.totalorder %s154, %s170
    %p172 = scmp.eq.s32.totalorder %s17, 0
    %p173 = por %p171, %p172
    %p174 = scmp.le.s32.totalorder 1, %s11
    %p175 = scmp.lt.s32.totalorder %s11, 3
    %p176 = pnand %p174, %p175
    %p177 = pneg %p176
    // Predicated region
    $region9: #{encoder_forward.1} parent=5 // pred_check
      _
    $region10: #{encoder_forward.1} parent=5 // pred_check_branch
      %179 = sbr.rel (%p176) target = $region12
    $region11: #{encoder_forward.1} parent=5 // pred_region
      %s180 = ssub.s32 %s11, 1
      // Predicated region
      $region13: #{encoder_forward.1} parent=11 // pred_check
        %p181 = pneg %p72
      $region14: #{encoder_forward.1} parent=11 // pred_check_branch
        %183 = sbr.rel (%p181) target = $region16
      $region15: #{encoder_forward.1} parent=11 // pred_region
        _
      $region16: #{encoder_forward.1} parent=11 // pred_fallthru
        _
      // Predicated region
      $region17: #{encoder_forward.1} parent=11 // pred_check
        %p184 = pneg %p93
      $region18: #{encoder_forward.1} parent=11 // pred_check_branch
        %186 = sbr.rel (%p184) target = $region20
      $region19: #{encoder_forward.1} parent=11 // pred_region
        _
      $region20: #{encoder_forward.1} parent=11 // pred_fallthru
        _
      // Predicated region
      $region21: #{encoder_forward.1} parent=11 // pred_check
        %p187 = pneg %p114
      $region22: #{encoder_forward.1} parent=11 // pred_check_branch
        %189 = sbr.rel (%p187) target = $region24
      $region23: #{encoder_forward.1} parent=11 // pred_region
        _
      $region24: #{encoder_forward.1} parent=11 // pred_fallthru
        _
      // Predicated region
      $region25: #{encoder_forward.1} parent=11 // pred_check
        %p190 = pneg %p140
      $region26: #{encoder_forward.1} parent=11 // pred_check_branch
        %192 = sbr.rel (%p190) target = $region28
      $region27: #{encoder_forward.1} parent=11 // pred_region
        %p193 = scmp.lt.s32.totalorder %s20, 0
        %s194 = scalar_select %p193, %s20, 0
        %s195 = smul.addr %s194, 2
        %s196 = scalar_lea.vmem %s4, %s195
      $region28: #{encoder_forward.1} parent=11 // pred_fallthru
        _
    $region12: #{encoder_forward.1} parent=5 // pred_fallthru
      _
    %p197 = scmp.lt.s32.totalorder %s11, 2
    // Predicated region
    $region29: #{encoder_forward.1} parent=5 // pred_check
      %p198 = pneg %p197
    $region30: #{encoder_forward.1} parent=5 // pred_check_branch
      %200 = sbr.rel (%p198) target = $region32
    $region31: #{encoder_forward.1} parent=5 // pred_region
      // Predicated region
      $region33: #{encoder_forward.1} parent=31 // pred_check
        %p201 = pneg %p45
      $region34: #{encoder_forward.1} parent=31 // pred_check_branch
        %203 = sbr.rel (%p201) target = $region36
      $region35: #{encoder_forward.1} parent=31 // pred_region
        %p204 = scmp.lt.s32.totalorder %s18, 0
        %s205 = scalar_select %p204, %s18, 0
        %p206 = scmp.lt.s32.totalorder %s19, 1
        %s207 = scalar_select %p206, %s19, 1
        %s208 = smul.addr %s205, 2
        %s209 = sadd.s32 %s207, %s208
        %s210 = smul.addr %s209, 8
        %s211 = scalar_lea.vmem %s0, %s210
      $region36: #{encoder_forward.1} parent=31 // pred_fallthru
        _
    $region32: #{encoder_forward.1} parent=5 // pred_fallthru
      _
    %p212 = scmp.le.s32.totalorder 1, %s11
    %p213 = scmp.lt.s32.totalorder %s11, 3
    %p214 = pnand %p212, %p213
    %p215 = pneg %p214
    // Predicated region
    $region37: #{encoder_forward.1} parent=5 // pred_check
      _
    $region38: #{encoder_forward.1} parent=5 // pred_check_branch
      %217 = sbr.rel (%p214) target = $region40
    $region39: #{encoder_forward.1} parent=5 // pred_region
      %s218 = ssub.s32 %s11, 1
      %p219 = scmp.lt.s32.totalorder %s20, 0
      %s220 = scalar_select %p219, %s20, 0
      %p221 = scmp.lt.s32.totalorder %s21, 1
      %s222 = scalar_select %p221, %s21, 1
      %s223 = smul.addr %s220, 2
      %s224 = sadd.s32 %s222, %s223
      %s225 = smul.addr %s224, 8
      %s226 = scalar_lea.vmem %s0, %s225
      %p227 = pneg %p51
      %p228 = pneg %p48
      %p229 = pneg %p72
      %p230 = pneg %p69
      %p231 = pneg %p93
      %p232 = pneg %p90
      %p233 = pneg %p114
      %p234 = pneg %p111
      %p235 = scmp.lt.s32.totalorder %s20, 0
      %s236 = scalar_select %p235, %s20, 0
      %s237 = smul.addr %s236, 2
      %s238 = scalar_lea.vmem %s4, %s237
      %p239 = pneg %p140
      %p240 = pneg %p137
      %p241 = pneg %p166
      %p242 = pneg %p163
      %p243 = scmp.lt.s32.totalorder %s20, 0
      %s244 = scalar_select %p243, %s20, 0
      %s245 = smul.addr %s244, 2
      %s246 = scalar_lea.vmem %s5, %s245
      %p247 = scmp.lt.s32.totalorder %s20, 0
      %s248 = scalar_select %p247, %s20, 0
      %p249 = scmp.lt.s32.totalorder %s21, 1
      %s250 = scalar_select %p249, %s21, 1
      %s251 = smul.addr %s248, 2
      %s252 = sadd.s32 %s250, %s251
      %s253 = smul.addr %s252, 8
      %s254 = scalar_lea.vmem %s0, %s253
      %p255 = scmp.lt.s32.totalorder %s20, 0
      %s256 = scalar_select %p255, %s20, 0
      %s257 = smul.addr %s256, 2
      %s258 = scalar_lea.vmem %s4, %s257
      %p259 = scmp.lt.s32.totalorder %s20, 0
      %s260 = scalar_select %p259, %s20, 0
      %s261 = smul.addr %s260, 2
      %s262 = scalar_lea.vmem %s5, %s261
      %p263 = scmp.eq.s32.totalorder %s21, 0
      // Predicated region
      $region41: #{encoder_forward.1} parent=39 // pred_check
        %p264 = pneg %p263
      $region42: #{encoder_forward.1} parent=39 // pred_check_branch
        %266 = sbr.rel (%p264) target = $region44
      $region43: #{encoder_forward.1} parent=39 // pred_region
        %vm267 = vcmask 7168
        %268 = vst.msk [vmem:[#allocation2] sm:$0xff] %vm267, 0.0
      $region44: #{encoder_forward.1} parent=39 // pred_fallthru
        _
      %v269 = vld [vmem:[#allocation2] sm:$0xff]
      %v270 = vld [vmem:[%s254] sm:$0xff]
      %271 = vadd.xlane.f32.xlu0 %v270
      %v272 = vpop.xlane.xlu0 %271
      %v273 = vadd.f32 %v269, %v272
      %vm274 = vcmask 7168
      %275 = vst.msk [vmem:[#allocation2] sm:$0xff] %vm274, %v273
      %p276 = scmp.eq.s32.totalorder %s21, 1
      // Predicated region
      $region45: #{encoder_forward.1} parent=39 // pred_check
        %p277 = pneg %p276
      $region46: #{encoder_forward.1} parent=39 // pred_check_branch
        %279 = sbr.rel (%p277) target = $region48
      $region47: #{encoder_forward.1} parent=39 // pred_region
        %v280 = vld [vmem:[#allocation2] sm:$0xff]
        %v281 = vld [vmem:[%s1] sm:$0xff]
        %283 = vset.pattern.permute.xlu0 0
        %284 = vperm.xlu0 %283, %v280
        %v285 = vpop.permute.xlu0 %284
        %v287 = vmul.f32 %v285, %v281
        %v288 = vlaneseq
        %v289 = vand.u32 %v288, 127
        %v290 = vlaneseq
        %v291 = vshrl.u32 %v290, 7
        %v292 = vmul.u32 %v291, 4
        %vm293 = vcmp.ge.s32.totalorder %v289, %v292
        %v294 = vadd.s32 %v291, 1
        %v295 = vmul.u32 %v294, 4
        %vm296 = vcmp.lt.s32.totalorder %v289, %v295
        %vm297 = vmand %vm293, %vm296
        %v298 = vsel %vm297, 1, 0
        %v299 = vcvt.s32.f32 %v298
        %v300 = vld [vmem:[%s2] sm:$0x1]
        %v302 = vlaneseq
        %v303 = vshrl.u32 %v302, 7
        %v304 = vsub.s32 0, %v303
        %v305 = vrot.slane %v300, %v304
        %vm307 = vcmask 64512
        %v309 = vsel %vm307, %v299, 0
        %311 = vmatprep.subr.mxu0 0.0
        %312 = vmatpush1.msra.mxu0 %v287
        %313 = vmatprep.subr.mxu0 0.0
        %314 = vmatpush1.msra.mxu0 0.0
        %315 = vmatprep.subr.mxu0 0.0
        %316 = vmatpush1.msra.mxu0 0.0
        %317 = vmatprep.subr.mxu0 0.0
        %318 = vmatpush1.msra.mxu0 0.0
        %319 = vmatprep.subr.mxu0 0.0
        %320 = vmatpush1.msra.mxu0 0.0
        %321 = vmatprep.subr.mxu0 0.0
        %322 = vmatpush1.msra.mxu0 0.0
        %323 = vmatprep.subr.mxu0 0.0
        %324 = vmatpush1.msra.mxu0 0.0
        %325 = vmatprep.subr.mxu0 0.0
        %326 = vmatpush1.msra.mxu0 0.0
        %327 = vmatprep.subr.mxu0 0.0
        %328 = vmatpush1.msra.mxu0 0.0
        %329 = vmatprep.subr.mxu0 0.0
        %330 = vmatpush1.msra.mxu0 0.0
        %331 = vmatprep.subr.mxu0 0.0
        %332 = vmatpush1.msra.mxu0 0.0
        %333 = vmatprep.subr.mxu0 0.0
        %334 = vmatpush1.msra.mxu0 0.0
        %335 = vmatprep.subr.mxu0 0.0
        %336 = vmatpush1.msra.mxu0 0.0
        %337 = vmatprep.subr.mxu0 0.0
        %338 = vmatpush1.msra.mxu0 0.0
        %339 = vmatprep.subr.mxu0 0.0
        %340 = vmatpush1.msra.mxu0 0.0
        %341 = vmatprep.subr.mxu0 0.0
        %342 = vmatpush1.msra.mxu0 0.0
        %343 = vmatprep.subr.mxu0 0.0
        %344 = vmatpush1.msra.mxu0 0.0
        %345 = vmatprep.subr.mxu0 0.0
        %346 = vmatpush1.msra.mxu0 0.0
        %347 = vmatprep.subr.mxu0 0.0
        %348 = vmatpush1.msra.mxu0 0.0
        %349 = vmatprep.subr.mxu0 0.0
        %350 = vmatpush1.msra.mxu0 0.0
        %351 = vmatprep.subr.mxu0 0.0
        %352 = vmatpush1.msra.mxu0 0.0
        %353 = vmatprep.subr.mxu0 0.0
        %354 = vmatpush1.msra.mxu0 0.0
        %355 = vmatprep.subr.mxu0 0.0
        %356 = vmatpush1.msra.mxu0 0.0
        %357 = vmatprep.subr.mxu0 0.0
        %358 = vmatpush1.msra.mxu0 0.0
        %359 = vmatprep.subr.mxu0 0.0
        %360 = vmatpush1.msra.mxu0 0.0
        %361 = vmatprep.subr.mxu0 0.0
        %362 = vmatpush1.msra.mxu0 0.0
        %363 = vmatprep.subr.mxu0 0.0
        %364 = vmatpush1.msra.mxu0 0.0
        %365 = vmatprep.subr.mxu0 0.0
        %366 = vmatpush1.msra.mxu0 0.0
        %367 = vmatprep.subr.mxu0 0.0
        %368 = vmatpush1.msra.mxu0 0.0
        %369 = vmatprep.subr.mxu0 0.0
        %370 = vmatpush1.msra.mxu0 0.0
        %371 = vmatprep.subr.mxu0 0.0
        %372 = vmatpush1.msra.mxu0 0.0
        %373 = vmatprep.subr.mxu0 0.0
        %374 = vmatpush1.msra.mxu0 0.0
        %375 = vmatprep.mubr.f32.mxu0 0.0
        %376 = vmatmul.mubr.f32.gmra.mrb[0].mxu0 %v309
        %v377 = vpop.f32.mrb[0].mxu0
        %v378 = vadd.f32 %v305, %v377
        %v379 = vpop.f32.mrb[0].mxu0
        %380 = vdwg.mxu0
        %vm381 = vcmp.lt.s32.totalorder %v289, 2
        %v382 = vsel %vm381, %v378, -1e+30
        %vm383 = vcmask 1041408
        %v384 = vsel %vm383, %v382, -inf
        %385 = vmax.xlane.f32.xlu0 %v384
        %v386 = vpop.xlane.xlu0 %385
        %v387 = vsub.f32 %v382, %v386
        %v388 = vmul.f32 %v387, 1.442695
        %v389 = vpow.pop %v388
        %v390 = vsel %vm383, %v389, 0.0
        %391 = vadd.xlane.f32.xlu0 %v390
        %v392 = vpop.xlane.xlu0 %391
        %v393 = vlog2.pop %v392
        %v394 = vmul.f32 %v393, 0.6931472
        %v395 = vadd.f32 %v386, %v394
        %v396 = vsub.f32 %v378, %v395
        %v397 = vld [vmem:[%s258] sm:$0x3]
        %398 = vset.pattern.permute.xlu0 0
        %399 = vperm.xlu0 %398, %v397
        %v400 = vpop.permute.xlu0 %399
        %vm401 = vcmp.eq.s32.totalorder %v289, %v400
        %v402 = vsel %vm401, 1, 0
        %v403 = vcvt.s32.f32 %v402
        %v404 = vmul.f32 %v403, %v396
        %v405 = vsel %vm383, %v404, 0.0
        %406 = vadd.xlane.f32.xlu0 %v405
        %v407 = vpop.xlane.xlu0 %406
        %v408 = vsub.f32 0.0, %v407
        %v409 = vld [vmem:[%s3] sm:$0x1]
        %v411 = vlaneseq
        %v412 = vshrl.u32 %v411, 7
        %v413 = vsub.s32 0, %v412
        %v414 = vrot.slane %v409, %v413
        %v416 = vmul.f32 %v403, %v414
        %v417 = vsel %vm383, %v416, 0.0
        %418 = vadd.xlane.f32.xlu0 %v417
        %v419 = vpop.xlane.xlu0 %418
        %v420 = vsel %vm381, %v378, 0.0
        %vm421 = vcmp.eq.s32.totalorder %v289, 2
        %v422 = vmul.f32 %v419, %v408
        %v423 = vsel %vm421, %v422, 0.0
        %v424 = vadd.f32 %v420, %v423
        %vm425 = vcmp.eq.s32.totalorder %v289, 3
        %v426 = vsel %vm425, %v419, 0.0
        %v427 = vadd.f32 %v424, %v426
        %428 = vst [vmem:[%s262] sm:$0x3] %v427
      $region48: #{encoder_forward.1} parent=39 // pred_fallthru
        _
      %p429 = scmp.lt.s32.totalorder %s20, 0
      %s430 = scalar_select %p429, %s20, 0
      %s431 = smul.addr %s430, 2
      %s432 = scalar_lea.vmem %s5, %s431
      // Predicated region
      $region49: #{encoder_forward.1} parent=39 // pred_check
        %p433 = pneg %p163
      $region50: #{encoder_forward.1} parent=39 // pred_check_branch
        %435 = sbr.rel (%p433) target = $region52
      $region51: #{encoder_forward.1} parent=39 // pred_region
        _
      $region52: #{encoder_forward.1} parent=39 // pred_fallthru
        _
      // Predicated region
      $region53: #{encoder_forward.1} parent=39 // pred_check
        %p436 = pneg %p163
      $region54: #{encoder_forward.1} parent=39 // pred_check_branch
        %438 = sbr.rel (%p436) target = $region56
      $region55: #{encoder_forward.1} parent=39 // pred_region
        %p439 = scmp.lt.s32.totalorder %s20, 0
        %s440 = scalar_select %p439, %s20, 0
        %s441 = smul.addr %s440, 2
        %s442 = scalar_lea.vmem %s5, %s441
      $region56: #{encoder_forward.1} parent=39 // pred_fallthru
        _
    $region40: #{encoder_forward.1} parent=5 // pred_fallthru
      _
    %p443 = scmp.le.s32.totalorder 2, %s11
    // Predicated region
    $region57: #{encoder_forward.1} parent=5 // pred_check
      %p444 = pneg %p443
    $region58: #{encoder_forward.1} parent=5 // pred_check_branch
      %446 = sbr.rel (%p444) target = $region60
    $region59: #{encoder_forward.1} parent=5 // pred_region
      %s447 = ssub.s32 %s11, 2
    $region60: #{encoder_forward.1} parent=5 // pred_fallthru
      _
  $region6: #{encoder_forward.1} parent=0 // loop_footer
    %s15 = sadd.s32 1, %s11
  $region7: #{encoder_forward.1} parent=0 // loop_footer_branch
    %10 = sbr.rel target = $region3
  $region8: #{encoder_forward.1} parent=0 // loop_exit
    _

</llo_original>
